<compile_context>
chip_gen: v7x
topology: tpu7x:2x2x1
jax: 0.10.0
libtpu: 0.0.40
codegen_flags: <defaults>
</compile_context>

<pallas_src>
import math

import jax
import jax.numpy as jnp
from jax.experimental import pallas as pl
from jax.experimental.pallas import tpu as pltpu

IN_FEATURES = 10 * 12    # 120
HIDDEN = 32
OUT_FEATURES = 6
NEG_SLOPE = 0.01         # F.leaky_relu default
MAX_TB = 1024            # batch tile (rows per grid step), multiple of 8


def _leaky_relu(x):
    # maximum(x, slope*x) == leaky_relu for 0 < slope < 1
    return jnp.maximum(x, NEG_SLOPE * x)


def _round_up(n, m):
    return ((n + m - 1) // m) * m


def mlp_kernel(x_ref,
               w1_ref, b1_ref,
               w2_ref, b2_ref,
               w3_ref, b3_ref,
               w4_ref, b4_ref,
               out_ref):
    x = x_ref[...]

    h = jnp.dot(x, w1_ref[...], preferred_element_type=jnp.float32) + b1_ref[...]
    h = _leaky_relu(h)

    h = jnp.dot(h, w2_ref[...], preferred_element_type=jnp.float32) + b2_ref[...]
    h = _leaky_relu(h)

    h = jnp.dot(h, w3_ref[...], preferred_element_type=jnp.float32) + b3_ref[...]
    h = _leaky_relu(h)

    logits = jnp.dot(h, w4_ref[...], preferred_element_type=jnp.float32) + b4_ref[...]

    # log_softmax over the 6 real logits (Mosaic masks the minor-dim reduction).
    m = jnp.max(logits, axis=-1, keepdims=True)
    shifted = logits - m
    lse = jnp.log(jnp.sum(jnp.exp(shifted), axis=-1, keepdims=True))
    out_ref[...] = (shifted - lse).astype(out_ref.dtype)


def ainet_mk1_forward(x, params):
    """x: (B, 120) f32.  params: weights stored (in, out), biases (1, out)."""
    B = x.shape[0]
    w1, b1 = params["w1"], params["b1"]
    w2, b2 = params["w2"], params["b2"]
    w3, b3 = params["w3"], params["b3"]
    w4, b4 = params["w4"], params["b4"]

    # Batch tiling: TB rows per grid step (multiple of 8), B padded to TB mult.
    TB = min(MAX_TB, _round_up(B, 8))
    Bp = _round_up(B, TB)
    if Bp != B:
        x = jnp.pad(x, ((0, Bp - B), (0, 0)))
    grid = (Bp // TB,)

    # Weights/biases: constant block index -> stay resident in VMEM, no re-DMA.
    resident = lambda a: pl.BlockSpec(a.shape, lambda i: (0, 0))

    out = pl.pallas_call(
        mlp_kernel,
        out_shape=jax.ShapeDtypeStruct((Bp, OUT_FEATURES), jnp.float32),
        grid=grid,
        in_specs=[pl.BlockSpec((TB, IN_FEATURES), lambda i: (i, 0)),
                  resident(w1), resident(b1),
                  resident(w2), resident(b2),
                  resident(w3), resident(b3),
                  resident(w4), resident(b4)],
        out_specs=pl.BlockSpec((TB, OUT_FEATURES), lambda i: (i, 0)),
        compiler_params=pltpu.CompilerParams(
            dimension_semantics=("parallel",)),
    )(x, w1, b1, w2, b2, w3, b3, w4, b4)

    return out if Bp == B else out[:B]


def init_params(key):
    """Deterministic init mimicking nn.Linear default: U(-1/sqrt(fan_in), ...)."""
    def linear(key, fan_in, fan_out):
        kw, kb = jax.random.split(key)
        bound = 1.0 / math.sqrt(fan_in)
        w = jax.random.uniform(kw, (fan_in, fan_out), jnp.float32, -bound, bound)
        b = jax.random.uniform(kb, (1, fan_out), jnp.float32, -bound, bound)
        return w, b

    k1, k2, k3, k4 = jax.random.split(key, 4)
    w1, b1 = linear(k1, IN_FEATURES, HIDDEN)
    w2, b2 = linear(k2, HIDDEN, HIDDEN)
    w3, b3 = linear(k3, HIDDEN, HIDDEN)
    w4, b4 = linear(k4, HIDDEN, OUT_FEATURES)
    return {"w1": w1, "b1": b1, "w2": w2, "b2": b2,
            "w3": w3, "b3": b3, "w4": w4, "b4": b4}


def reference_forward(x, params):
    h = x @ params["w1"] + params["b1"]
    h = jnp.where(h > 0, h, NEG_SLOPE * h)
    h = h @ params["w2"] + params["b2"]
    h = jnp.where(h > 0, h, NEG_SLOPE * h)
    h = h @ params["w3"] + params["b3"]
    h = jnp.where(h > 0, h, NEG_SLOPE * h)
    logits = h @ params["w4"] + params["b4"]
    return jax.nn.log_softmax(logits, axis=1)


# TODO(synk): replay_memory / optimizer / train() are training-time host logic
# with no forward-pass compute; only forward() is implemented as a kernel.

if __name__ == "__main__":
    key = jax.random.PRNGKey(0)
    kp, kx = jax.random.split(key)

    params = init_params(kp)
    B = 8
    x = jax.random.normal(kx, (B, IN_FEATURES), jnp.float32)

    out = ainet_mk1_forward(x, params)
    out = jax.block_until_ready(out)

    ref = reference_forward(x, params)
    assert out.shape == (B, OUT_FEATURES)
    assert jnp.allclose(out, ref, atol=1e-5, rtol=1e-5), "mismatch vs reference"

    print("KERNEL_OK")
</pallas_src>

<mosaic_0001>
module attributes {stable_mosaic.version = 11 : i64} {
  func.func @mlp_kernel(%arg0: i32, %arg1: memref<8x120xf32, #tpu.memory_space<vmem>>, %arg2: memref<120x32xf32, #tpu.memory_space<vmem>>, %arg3: memref<1x32xf32, #tpu.memory_space<vmem>>, %arg4: memref<32x32xf32, #tpu.memory_space<vmem>>, %arg5: memref<1x32xf32, #tpu.memory_space<vmem>>, %arg6: memref<32x32xf32, #tpu.memory_space<vmem>>, %arg7: memref<1x32xf32, #tpu.memory_space<vmem>>, %arg8: memref<32x6xf32, #tpu.memory_space<vmem>>, %arg9: memref<1x6xf32, #tpu.memory_space<vmem>>, %arg10: memref<8x6xf32, #tpu.memory_space<vmem>>) attributes {dimension_semantics = [#tpu.dimension_semantics<parallel>], iteration_bounds = array<i64: 1>, scalar_prefetch = 0 : i64, scratch_operands = 0 : i64, tpu.core_type = #tpu.core_type<tc>, window_params = [{transform_indices = @transform_0, window_bounds = array<i64: 8, 120>}, {pipeline_mode = #tpu.pipeline_mode<synchronous>, transform_indices = @transform_1, window_bounds = array<i64: 120, 32>}, {pipeline_mode = #tpu.pipeline_mode<synchronous>, transform_indices = @transform_2, window_bounds = array<i64: 1, 32>}, {pipeline_mode = #tpu.pipeline_mode<synchronous>, transform_indices = @transform_3, window_bounds = array<i64: 32, 32>}, {pipeline_mode = #tpu.pipeline_mode<synchronous>, transform_indices = @transform_4, window_bounds = array<i64: 1, 32>}, {pipeline_mode = #tpu.pipeline_mode<synchronous>, transform_indices = @transform_5, window_bounds = array<i64: 32, 32>}, {pipeline_mode = #tpu.pipeline_mode<synchronous>, transform_indices = @transform_6, window_bounds = array<i64: 1, 32>}, {pipeline_mode = #tpu.pipeline_mode<synchronous>, transform_indices = @transform_7, window_bounds = array<i64: 32, 6>}, {pipeline_mode = #tpu.pipeline_mode<synchronous>, transform_indices = @transform_8, window_bounds = array<i64: 1, 6>}, {transform_indices = @transform_9, window_bounds = array<i64: 8, 6>}]} {
    %c0 = arith.constant 0 : index
    %c0_0 = arith.constant 0 : index
    %0 = vector.load %arg1[%c0, %c0_0] : memref<8x120xf32, #tpu.memory_space<vmem>>, vector<8x120xf32>
    %c0_1 = arith.constant 0 : index
    %c0_2 = arith.constant 0 : index
    %1 = vector.load %arg2[%c0_1, %c0_2] : memref<120x32xf32, #tpu.memory_space<vmem>>, vector<120x32xf32>
    %cst = arith.constant dense<0.000000e+00> : vector<8x32xf32>
    %2 = tpu.matmul %0, %1, %cst {dimension_numbers = #tpu.dot_dimension_numbers<[1], [0], [0], [1], [0, 0, 1, 1], [], []>} : vector<8x120xf32>, vector<120x32xf32>, vector<8x32xf32> -> vector<8x32xf32>
    %c0_3 = arith.constant 0 : index
    %c0_4 = arith.constant 0 : index
    %3 = vector.load %arg3[%c0_3, %c0_4] : memref<1x32xf32, #tpu.memory_space<vmem>>, vector<1x32xf32>
    %4 = vector.broadcast %3 : vector<1x32xf32> to vector<8x32xf32>
    %5 = arith.addf %2, %4 : vector<8x32xf32>
    %cst_5 = arith.constant 0.00999999977 : f32
    %6 = vector.broadcast %cst_5 : f32 to vector<8x32xf32>
    %7 = arith.mulf %6, %5 : vector<8x32xf32>
    %8 = arith.maximumf %5, %7 : vector<8x32xf32>
    %c0_6 = arith.constant 0 : index
    %c0_7 = arith.constant 0 : index
    %9 = vector.load %arg4[%c0_6, %c0_7] : memref<32x32xf32, #tpu.memory_space<vmem>>, vector<32x32xf32>
    %cst_8 = arith.constant dense<0.000000e+00> : vector<8x32xf32>
    %10 = tpu.matmul %8, %9, %cst_8 {dimension_numbers = #tpu.dot_dimension_numbers<[1], [0], [0], [1], [0, 0, 1, 1], [], []>} : vector<8x32xf32>, vector<32x32xf32>, vector<8x32xf32> -> vector<8x32xf32>
    %c0_9 = arith.constant 0 : index
    %c0_10 = arith.constant 0 : index
    %11 = vector.load %arg5[%c0_9, %c0_10] : memref<1x32xf32, #tpu.memory_space<vmem>>, vector<1x32xf32>
    %12 = vector.broadcast %11 : vector<1x32xf32> to vector<8x32xf32>
    %13 = arith.addf %10, %12 : vector<8x32xf32>
    %cst_11 = arith.constant 0.00999999977 : f32
    %14 = vector.broadcast %cst_11 : f32 to vector<8x32xf32>
    %15 = arith.mulf %14, %13 : vector<8x32xf32>
    %16 = arith.maximumf %13, %15 : vector<8x32xf32>
    %c0_12 = arith.constant 0 : index
    %c0_13 = arith.constant 0 : index
    %17 = vector.load %arg6[%c0_12, %c0_13] : memref<32x32xf32, #tpu.memory_space<vmem>>, vector<32x32xf32>
    %cst_14 = arith.constant dense<0.000000e+00> : vector<8x32xf32>
    %18 = tpu.matmul %16, %17, %cst_14 {dimension_numbers = #tpu.dot_dimension_numbers<[1], [0], [0], [1], [0, 0, 1, 1], [], []>} : vector<8x32xf32>, vector<32x32xf32>, vector<8x32xf32> -> vector<8x32xf32>
    %c0_15 = arith.constant 0 : index
    %c0_16 = arith.constant 0 : index
    %19 = vector.load %arg7[%c0_15, %c0_16] : memref<1x32xf32, #tpu.memory_space<vmem>>, vector<1x32xf32>
    %20 = vector.broadcast %19 : vector<1x32xf32> to vector<8x32xf32>
    %21 = arith.addf %18, %20 : vector<8x32xf32>
    %cst_17 = arith.constant 0.00999999977 : f32
    %22 = vector.broadcast %cst_17 : f32 to vector<8x32xf32>
    %23 = arith.mulf %22, %21 : vector<8x32xf32>
    %24 = arith.maximumf %21, %23 : vector<8x32xf32>
    %c0_18 = arith.constant 0 : index
    %c0_19 = arith.constant 0 : index
    %25 = vector.load %arg8[%c0_18, %c0_19] : memref<32x6xf32, #tpu.memory_space<vmem>>, vector<32x6xf32>
    %cst_20 = arith.constant dense<0.000000e+00> : vector<8x6xf32>
    %26 = tpu.matmul %24, %25, %cst_20 {dimension_numbers = #tpu.dot_dimension_numbers<[1], [0], [0], [1], [0, 0, 1, 1], [], []>} : vector<8x32xf32>, vector<32x6xf32>, vector<8x6xf32> -> vector<8x6xf32>
    %c0_21 = arith.constant 0 : index
    %c0_22 = arith.constant 0 : index
    %27 = vector.load %arg9[%c0_21, %c0_22] : memref<1x6xf32, #tpu.memory_space<vmem>>, vector<1x6xf32>
    %28 = vector.broadcast %27 : vector<1x6xf32> to vector<8x6xf32>
    %29 = arith.addf %26, %28 : vector<8x6xf32>
    %cst_23 = arith.constant dense<0xFF800000> : vector<8xf32>
    %30 = vector.multi_reduction <maximumf>, %29, %cst_23 [1] : vector<8x6xf32> to vector<8xf32>
    %31 = vector.shape_cast %30 : vector<8xf32> to vector<8x1xf32>
    %32 = vector.broadcast %31 : vector<8x1xf32> to vector<8x6xf32>
    %33 = arith.subf %29, %32 : vector<8x6xf32>
    %34 = math.exp %33 : vector<8x6xf32>
    %cst_24 = arith.constant dense<0.000000e+00> : vector<8xf32>
    %35 = vector.multi_reduction <add>, %34, %cst_24 [1] : vector<8x6xf32> to vector<8xf32>
    %36 = vector.shape_cast %35 : vector<8xf32> to vector<8x1xf32>
    %37 = math.log %36 : vector<8x1xf32>
    %38 = vector.broadcast %37 : vector<8x1xf32> to vector<8x6xf32>
    %39 = arith.subf %33, %38 : vector<8x6xf32>
    %c0_25 = arith.constant 0 : index
    %c0_26 = arith.constant 0 : index
    %40 = vector.load %arg10[%c0_25, %c0_26] : memref<8x6xf32, #tpu.memory_space<vmem>>, vector<8x6xf32>
    tpu.vector_store %arg10[%c0_25, %c0_26], %39 {strides = array<i32>} : memref<8x6xf32, #tpu.memory_space<vmem>>, vector<8x6xf32>,
    return
  }
  func.func @transform_0(%arg0: i32) -> (i32, i32) {
    %c0_i32 = arith.constant 0 : i32
    %c0_i32_0 = arith.constant 0 : i32
    return %arg0, %c0_i32 : i32, i32
  }
  func.func @transform_1(%arg0: i32) -> (i32, i32) {
    %c0_i32 = arith.constant 0 : i32
    %c0_i32_0 = arith.constant 0 : i32
    %c0_i32_1 = arith.constant 0 : i32
    return %c0_i32, %c0_i32_0 : i32, i32
  }
  func.func @transform_2(%arg0: i32) -> (i32, i32) {
    %c0_i32 = arith.constant 0 : i32
    %c0_i32_0 = arith.constant 0 : i32
    %c0_i32_1 = arith.constant 0 : i32
    return %c0_i32, %c0_i32_0 : i32, i32
  }
  func.func @transform_3(%arg0: i32) -> (i32, i32) {
    %c0_i32 = arith.constant 0 : i32
    %c0_i32_0 = arith.constant 0 : i32
    %c0_i32_1 = arith.constant 0 : i32
    return %c0_i32, %c0_i32_0 : i32, i32
  }
  func.func @transform_4(%arg0: i32) -> (i32, i32) {
    %c0_i32 = arith.constant 0 : i32
    %c0_i32_0 = arith.constant 0 : i32
    %c0_i32_1 = arith.constant 0 : i32
    return %c0_i32, %c0_i32_0 : i32, i32
  }
  func.func @transform_5(%arg0: i32) -> (i32, i32) {
    %c0_i32 = arith.constant 0 : i32
    %c0_i32_0 = arith.constant 0 : i32
    %c0_i32_1 = arith.constant 0 : i32
    return %c0_i32, %c0_i32_0 : i32, i32
  }
  func.func @transform_6(%arg0: i32) -> (i32, i32) {
    %c0_i32 = arith.constant 0 : i32
    %c0_i32_0 = arith.constant 0 : i32
    %c0_i32_1 = arith.constant 0 : i32
    return %c0_i32, %c0_i32_0 : i32, i32
  }
  func.func @transform_7(%arg0: i32) -> (i32, i32) {
    %c0_i32 = arith.constant 0 : i32
    %c0_i32_0 = arith.constant 0 : i32
    %c0_i32_1 = arith.constant 0 : i32
    return %c0_i32, %c0_i32_0 : i32, i32
  }
  func.func @transform_8(%arg0: i32) -> (i32, i32) {
    %c0_i32 = arith.constant 0 : i32
    %c0_i32_0 = arith.constant 0 : i32
    %c0_i32_1 = arith.constant 0 : i32
    return %c0_i32, %c0_i32_0 : i32, i32
  }
  func.func @transform_9(%arg0: i32) -> (i32, i32) {
    %c0_i32 = arith.constant 0 : i32
    %c0_i32_0 = arith.constant 0 : i32
    return %arg0, %c0_i32 : i32, i32
  }
}

</mosaic_0001>

<llo_original>
// kernel: tpu_custom_call.1
$region0: #{tpu_custom_call.1}
  #allocation0 [shape = 'u32[]', space=smem, size = 0x4, offset = 0x4, fixed_abs, tag = 'smem constant byte address 0x4 - core index']
  #allocation1 [shape = 'u32[144,128]{1,0:T(1,128)}', space=vmem, size = 0x12000, scoped, tag = 'internal scratch']
  %s0 = inlined_call_operand.vmem [shape: f32[8,120], index: 0, kind: input, shape index: {}]
  %s1 = inlined_call_operand.vmem [shape: f32[120,32], index: 1, kind: input, shape index: {}]
  %s2 = inlined_call_operand.vmem [shape: f32[1,32], index: 2, kind: input, shape index: {}]
  %s3 = inlined_call_operand.vmem [shape: f32[32,32], index: 3, kind: input, shape index: {}]
  %s4 = inlined_call_operand.vmem [shape: f32[1,32], index: 4, kind: input, shape index: {}]
  %s5 = inlined_call_operand.vmem [shape: f32[32,32], index: 5, kind: input, shape index: {}]
  %s6 = inlined_call_operand.vmem [shape: f32[1,32], index: 6, kind: input, shape index: {}]
  %s7 = inlined_call_operand.vmem [shape: f32[32,6], index: 7, kind: input, shape index: {}]
  %s8 = inlined_call_operand.vmem [shape: f32[1,6], index: 8, kind: input, shape index: {}]
  %s9 = inlined_call_operand.hbm [shape: f32[8,6], index: 9, kind: output, shape index: {}]
  %s10 = sld [smem:[#allocation0]]
  $region46: #{tpu_custom_call.1} parent=0
    _
  %s12 = ssub.s32 1, %s10
  %s13 = scalar_select 0, %s12, %s10
  $region1: #{tpu_custom_call.1} parent=0
    #allocation2 [shape = 'u8[4096]{0}', space=vmem, size = 0x1000, scoped, tag = 'output window, operand 0, single buffered']
    #allocation3 [shape = 's32[1]{0}', space=sflag, size = 0x4, scoped, tag = 'scoped memory for tpu_custom_call.1']
    %14 = vsyncpa [#allocation3], 0
    // Predicated region
    $region2: #{tpu_custom_call.1} parent=1 // pred_check
      _
    $region3: #{tpu_custom_call.1} parent=1 // pred_check_branch
      %16 = sbr.rel (0) target = $region5
    $region4: #{tpu_custom_call.1} parent=1 // pred_region
      _
    $region5: #{tpu_custom_call.1} parent=1 // pred_fallthru
      _
    // Predicated region
    $region6: #{tpu_custom_call.1} parent=1 // pred_check
      _
    $region7: #{tpu_custom_call.1} parent=1 // pred_check_branch
      %18 = sbr.rel (0) target = $region9
    $region8: #{tpu_custom_call.1} parent=1 // pred_region
      _
    $region9: #{tpu_custom_call.1} parent=1 // pred_fallthru
      _
    // Predicated region
    $region10: #{tpu_custom_call.1} parent=1 // pred_check
      _
    $region11: #{tpu_custom_call.1} parent=1 // pred_check_branch
      %20 = sbr.rel (0) target = $region13
    $region12: #{tpu_custom_call.1} parent=1 // pred_region
      _
    $region13: #{tpu_custom_call.1} parent=1 // pred_fallthru
      _
    // Predicated region
    $region14: #{tpu_custom_call.1} parent=1 // pred_check
      _
    $region15: #{tpu_custom_call.1} parent=1 // pred_check_branch
      %22 = sbr.rel (0) target = $region17
    $region16: #{tpu_custom_call.1} parent=1 // pred_region
      _
    $region17: #{tpu_custom_call.1} parent=1 // pred_fallthru
      _
    // Predicated region
    $region18: #{tpu_custom_call.1} parent=1 // pred_check
      _
    $region19: #{tpu_custom_call.1} parent=1 // pred_check_branch
      %24 = sbr.rel (0) target = $region21
    $region20: #{tpu_custom_call.1} parent=1 // pred_region
      _
    $region21: #{tpu_custom_call.1} parent=1 // pred_fallthru
      _
    // Predicated region
    $region22: #{tpu_custom_call.1} parent=1 // pred_check
      _
    $region23: #{tpu_custom_call.1} parent=1 // pred_check_branch
      %26 = sbr.rel (0) target = $region25
    $region24: #{tpu_custom_call.1} parent=1 // pred_region
      _
    $region25: #{tpu_custom_call.1} parent=1 // pred_fallthru
      _
    // Predicated region
    $region26: #{tpu_custom_call.1} parent=1 // pred_check
      _
    $region27: #{tpu_custom_call.1} parent=1 // pred_check_branch
      %28 = sbr.rel (0) target = $region29
    $region28: #{tpu_custom_call.1} parent=1 // pred_region
      _
    $region29: #{tpu_custom_call.1} parent=1 // pred_fallthru
      _
    // Predicated region
    $region30: #{tpu_custom_call.1} parent=1 // pred_check
      _
    $region31: #{tpu_custom_call.1} parent=1 // pred_check_branch
      %30 = sbr.rel (0) target = $region33
    $region32: #{tpu_custom_call.1} parent=1 // pred_region
      _
    $region33: #{tpu_custom_call.1} parent=1 // pred_fallthru
      _
    // Predicated region
    $region34: #{tpu_custom_call.1} parent=1 // pred_check
      _
    $region35: #{tpu_custom_call.1} parent=1 // pred_check_branch
      %32 = sbr.rel (0) target = $region37
    $region36: #{tpu_custom_call.1} parent=1 // pred_region
      _
    $region37: #{tpu_custom_call.1} parent=1 // pred_fallthru
      _
    %v33 = vld [vmem:[%s0] sm:$0xff]
    %v34 = vld [vmem:[%s1] sm:$0xff]
    %v35 = vld [vmem:[%s1 + $0x8] sm:$0xff]
    %v36 = vld [vmem:[%s1 + $0x10] sm:$0xff]
    %v37 = vld [vmem:[%s1 + $0x18] sm:$0xff]
    %v38 = vld [vmem:[%s1 + $0x20] sm:$0xff]
    %v39 = vld [vmem:[%s1 + $0x28] sm:$0xff]
    %v40 = vld [vmem:[%s1 + $0x30] sm:$0xff]
    %v41 = vld [vmem:[%s1 + $0x38] sm:$0xff]
    %v42 = vld [vmem:[%s1 + $0x40] sm:$0xff]
    %v43 = vld [vmem:[%s1 + $0x48] sm:$0xff]
    %v44 = vld [vmem:[%s1 + $0x50] sm:$0xff]
    %v45 = vld [vmem:[%s1 + $0x58] sm:$0xff]
    %v46 = vld [vmem:[%s1 + $0x60] sm:$0xff]
    %v47 = vld [vmem:[%s1 + $0x68] sm:$0xff]
    %v48 = vld [vmem:[%s1 + $0x70] sm:$0xff]
    %v49 = vld [vmem:[%s2] sm:$0x1]
    %v51 = vlaneseq
    %v52 = vshrl.u32 %v51, 7
    %v53 = vsub.s32 0, %v52
    %v54 = vrot.slane %v49, %v53
    %vm56 = vcmask 982016
    %v58 = vsel %vm56, %v33, 0
    %60 = vmatprep.subr.mxu0 0.0
    %61 = vmatpush1.msra.mxu0 %v34
    %62 = vmatprep.subr.mxu0 0.0
    %63 = vmatpush1.msra.mxu0 %v35
    %64 = vmatprep.subr.mxu0 0.0
    %65 = vmatpush1.msra.mxu0 %v36
    %66 = vmatprep.subr.mxu0 0.0
    %67 = vmatpush1.msra.mxu0 %v37
    %68 = vmatprep.subr.mxu0 0.0
    %69 = vmatpush1.msra.mxu0 %v38
    %70 = vmatprep.subr.mxu0 0.0
    %71 = vmatpush1.msra.mxu0 %v39
    %72 = vmatprep.subr.mxu0 0.0
    %73 = vmatpush1.msra.mxu0 %v40
    %74 = vmatprep.subr.mxu0 0.0
    %75 = vmatpush1.msra.mxu0 %v41
    %76 = vmatprep.subr.mxu0 0.0
    %77 = vmatpush1.msra.mxu0 %v42
    %78 = vmatprep.subr.mxu0 0.0
    %79 = vmatpush1.msra.mxu0 %v43
    %80 = vmatprep.subr.mxu0 0.0
    %81 = vmatpush1.msra.mxu0 %v44
    %82 = vmatprep.subr.mxu0 0.0
    %83 = vmatpush1.msra.mxu0 %v45
    %84 = vmatprep.subr.mxu0 0.0
    %85 = vmatpush1.msra.mxu0 %v46
    %86 = vmatprep.subr.mxu0 0.0
    %87 = vmatpush1.msra.mxu0 %v47
    %88 = vmatprep.subr.mxu0 0.0
    %89 = vmatpush1.msra.mxu0 %v48
    %90 = vmatprep.subr.mxu0 0.0
    %91 = vmatpush1.msra.mxu0 0.0
    %92 = vmatprep.subr.mxu0 0.0
    %93 = vmatpush1.msra.mxu0 0.0
    %94 = vmatprep.subr.mxu0 0.0
    %95 = vmatpush1.msra.mxu0 0.0
    %96 = vmatprep.subr.mxu0 0.0
    %97 = vmatpush1.msra.mxu0 0.0
    %98 = vmatprep.subr.mxu0 0.0
    %99 = vmatpush1.msra.mxu0 0.0
    %100 = vmatprep.subr.mxu0 0.0
    %101 = vmatpush1.msra.mxu0 0.0
    %102 = vmatprep.subr.mxu0 0.0
    %103 = vmatpush1.msra.mxu0 0.0
    %104 = vmatprep.subr.mxu0 0.0
    %105 = vmatpush1.msra.mxu0 0.0
    %106 = vmatprep.subr.mxu0 0.0
    %107 = vmatpush1.msra.mxu0 0.0
    %108 = vmatprep.subr.mxu0 0.0
    %109 = vmatpush1.msra.mxu0 0.0
    %110 = vmatprep.subr.mxu0 0.0
    %111 = vmatpush1.msra.mxu0 0.0
    %112 = vmatprep.subr.mxu0 0.0
    %113 = vmatpush1.msra.mxu0 0.0
    %114 = vmatprep.subr.mxu0 0.0
    %115 = vmatpush1.msra.mxu0 0.0
    %116 = vmatprep.subr.mxu0 0.0
    %117 = vmatpush1.msra.mxu0 0.0
    %118 = vmatprep.subr.mxu0 0.0
    %119 = vmatpush1.msra.mxu0 0.0
    %120 = vmatprep.subr.mxu0 0.0
    %121 = vmatpush1.msra.mxu0 0.0
    %122 = vmatprep.subr.mxu0 0.0
    %123 = vmatpush1.msra.mxu0 0.0
    %124 = vmatprep.mubr.f32.mxu0 0.0
    %125 = vmatmul.mubr.f32.gmra.mrb[0].mxu0 %v58
    %v126 = vpop.f32.mrb[0].mxu0
    %v127 = vadd.f32 %v54, %v126
    %v128 = vpop.f32.mrb[0].mxu0
    %129 = vdwg.mxu0
    %v130 = vmul.f32 %v127, 0.01
    %v131 = vmax.f32 %v127, %v130
    %v132 = vld [vmem:[%s3] sm:$0xff]
    %v133 = vld [vmem:[%s3 + $0x8] sm:$0xff]
    %v134 = vld [vmem:[%s3 + $0x10] sm:$0xff]
    %v135 = vld [vmem:[%s3 + $0x18] sm:$0xff]
    %v136 = vld [vmem:[%s4] sm:$0x1]
    %v138 = vlaneseq
    %v139 = vshrl.u32 %v138, 7
    %v140 = vsub.s32 0, %v139
    %v141 = vrot.slane %v136, %v140
    %vm143 = vcmask 261120
    %v145 = vsel %vm143, %v131, 0
    %147 = vmatprep.subr.mxu0 0.0
    %148 = vmatpush1.msra.mxu0 %v132
    %149 = vmatprep.subr.mxu0 0.0
    %150 = vmatpush1.msra.mxu0 %v133
    %151 = vmatprep.subr.mxu0 0.0
    %152 = vmatpush1.msra.mxu0 %v134
    %153 = vmatprep.subr.mxu0 0.0
    %154 = vmatpush1.msra.mxu0 %v135
    %155 = vmatprep.subr.mxu0 0.0
    %156 = vmatpush1.msra.mxu0 0.0
    %157 = vmatprep.subr.mxu0 0.0
    %158 = vmatpush1.msra.mxu0 0.0
    %159 = vmatprep.subr.mxu0 0.0
    %160 = vmatpush1.msra.mxu0 0.0
    %161 = vmatprep.subr.mxu0 0.0
    %162 = vmatpush1.msra.mxu0 0.0
    %163 = vmatprep.subr.mxu0 0.0
    %164 = vmatpush1.msra.mxu0 0.0
    %165 = vmatprep.subr.mxu0 0.0
    %166 = vmatpush1.msra.mxu0 0.0
    %167 = vmatprep.subr.mxu0 0.0
    %168 = vmatpush1.msra.mxu0 0.0
    %169 = vmatprep.subr.mxu0 0.0
    %170 = vmatpush1.msra.mxu0 0.0
    %171 = vmatprep.subr.mxu0 0.0
    %172 = vmatpush1.msra.mxu0 0.0
    %173 = vmatprep.subr.mxu0 0.0
    %174 = vmatpush1.msra.mxu0 0.0
    %175 = vmatprep.subr.mxu0 0.0
    %176 = vmatpush1.msra.mxu0 0.0
    %177 = vmatprep.subr.mxu0 0.0
    %178 = vmatpush1.msra.mxu0 0.0
    %179 = vmatprep.subr.mxu0 0.0
    %180 = vmatpush1.msra.mxu0 0.0
    %181 = vmatprep.subr.mxu0 0.0
    %182 = vmatpush1.msra.mxu0 0.0
    %183 = vmatprep.subr.mxu0 0.0
    %184 = vmatpush1.msra.mxu0 0.0
    %185 = vmatprep.subr.mxu0 0.0
    %186 = vmatpush1.msra.mxu0 0.0
    %187 = vmatprep.subr.mxu0 0.0
    %188 = vmatpush1.msra.mxu0 0.0
    %189 = vmatprep.subr.mxu0 0.0
    %190 = vmatpush1.msra.mxu0 0.0
    %191 = vmatprep.subr.mxu0 0.0
    %192 = vmatpush1.msra.mxu0 0.0
    %193 = vmatprep.subr.mxu0 0.0
    %194 = vmatpush1.msra.mxu0 0.0
    %195 = vmatprep.subr.mxu0 0.0
    %196 = vmatpush1.msra.mxu0 0.0
    %197 = vmatprep.subr.mxu0 0.0
    %198 = vmatpush1.msra.mxu0 0.0
    %199 = vmatprep.subr.mxu0 0.0
    %200 = vmatpush1.msra.mxu0 0.0
    %201 = vmatprep.subr.mxu0 0.0
    %202 = vmatpush1.msra.mxu0 0.0
    %203 = vmatprep.subr.mxu0 0.0
    %204 = vmatpush1.msra.mxu0 0.0
    %205 = vmatprep.subr.mxu0 0.0
    %206 = vmatpush1.msra.mxu0 0.0
    %207 = vmatprep.subr.mxu0 0.0
    %208 = vmatpush1.msra.mxu0 0.0
    %209 = vmatprep.subr.mxu0 0.0
    %210 = vmatpush1.msra.mxu0 0.0
    %211 = vmatprep.mubr.f32.mxu0 0.0
    %212 = vmatmul.mubr.f32.gmra.mrb[0].mxu0 %v145
    %v213 = vpop.f32.mrb[0].mxu0
    %v214 = vadd.f32 %v141, %v213
    %v215 = vpop.f32.mrb[0].mxu0
    %216 = vdwg.mxu0
    %v217 = vmul.f32 %v214, 0.01
    %v218 = vmax.f32 %v214, %v217
    %v219 = vld [vmem:[%s5] sm:$0xff]
    %v220 = vld [vmem:[%s5 + $0x8] sm:$0xff]
    %v221 = vld [vmem:[%s5 + $0x10] sm:$0xff]
    %v222 = vld [vmem:[%s5 + $0x18] sm:$0xff]
    %v223 = vld [vmem:[%s6] sm:$0x1]
    %v225 = vlaneseq
    %v226 = vshrl.u32 %v225, 7
    %v227 = vsub.s32 0, %v226
    %v228 = vrot.slane %v223, %v227
    %v231 = vsel %vm143, %v218, 0
    %233 = vmatprep.subr.mxu0 0.0
    %234 = vmatpush1.msra.mxu0 %v219
    %235 = vmatprep.subr.mxu0 0.0
    %236 = vmatpush1.msra.mxu0 %v220
    %237 = vmatprep.subr.mxu0 0.0
    %238 = vmatpush1.msra.mxu0 %v221
    %239 = vmatprep.subr.mxu0 0.0
    %240 = vmatpush1.msra.mxu0 %v222
    %241 = vmatprep.subr.mxu0 0.0
    %242 = vmatpush1.msra.mxu0 0.0
    %243 = vmatprep.subr.mxu0 0.0
    %244 = vmatpush1.msra.mxu0 0.0
    %245 = vmatprep.subr.mxu0 0.0
    %246 = vmatpush1.msra.mxu0 0.0
    %247 = vmatprep.subr.mxu0 0.0
    %248 = vmatpush1.msra.mxu0 0.0
    %249 = vmatprep.subr.mxu0 0.0
    %250 = vmatpush1.msra.mxu0 0.0
    %251 = vmatprep.subr.mxu0 0.0
    %252 = vmatpush1.msra.mxu0 0.0
    %253 = vmatprep.subr.mxu0 0.0
    %254 = vmatpush1.msra.mxu0 0.0
    %255 = vmatprep.subr.mxu0 0.0
    %256 = vmatpush1.msra.mxu0 0.0
    %257 = vmatprep.subr.mxu0 0.0
    %258 = vmatpush1.msra.mxu0 0.0
    %259 = vmatprep.subr.mxu0 0.0
    %260 = vmatpush1.msra.mxu0 0.0
    %261 = vmatprep.subr.mxu0 0.0
    %262 = vmatpush1.msra.mxu0 0.0
    %263 = vmatprep.subr.mxu0 0.0
    %264 = vmatpush1.msra.mxu0 0.0
    %265 = vmatprep.subr.mxu0 0.0
    %266 = vmatpush1.msra.mxu0 0.0
    %267 = vmatprep.subr.mxu0 0.0
    %268 = vmatpush1.msra.mxu0 0.0
    %269 = vmatprep.subr.mxu0 0.0
    %270 = vmatpush1.msra.mxu0 0.0
    %271 = vmatprep.subr.mxu0 0.0
    %272 = vmatpush1.msra.mxu0 0.0
    %273 = vmatprep.subr.mxu0 0.0
    %274 = vmatpush1.msra.mxu0 0.0
    %275 = vmatprep.subr.mxu0 0.0
    %276 = vmatpush1.msra.mxu0 0.0
    %277 = vmatprep.subr.mxu0 0.0
    %278 = vmatpush1.msra.mxu0 0.0
    %279 = vmatprep.subr.mxu0 0.0
    %280 = vmatpush1.msra.mxu0 0.0
    %281 = vmatprep.subr.mxu0 0.0
    %282 = vmatpush1.msra.mxu0 0.0
    %283 = vmatprep.subr.mxu0 0.0
    %284 = vmatpush1.msra.mxu0 0.0
    %285 = vmatprep.subr.mxu0 0.0
    %286 = vmatpush1.msra.mxu0 0.0
    %287 = vmatprep.subr.mxu0 0.0
    %288 = vmatpush1.msra.mxu0 0.0
    %289 = vmatprep.subr.mxu0 0.0
    %290 = vmatpush1.msra.mxu0 0.0
    %291 = vmatprep.subr.mxu0 0.0
    %292 = vmatpush1.msra.mxu0 0.0
    %293 = vmatprep.subr.mxu0 0.0
    %294 = vmatpush1.msra.mxu0 0.0
    %295 = vmatprep.subr.mxu0 0.0
    %296 = vmatpush1.msra.mxu0 0.0
    %297 = vmatprep.mubr.f32.mxu0 0.0
    %298 = vmatmul.mubr.f32.gmra.mrb[0].mxu0 %v231
    %v299 = vpop.f32.mrb[0].mxu0
    %v300 = vadd.f32 %v228, %v299
    %v301 = vpop.f32.mrb[0].mxu0
    %302 = vdwg.mxu0
    %v303 = vmul.f32 %v300, 0.01
    %v304 = vmax.f32 %v300, %v303
    %v305 = vld [vmem:[%s7] sm:$0xff]
    %v306 = vld [vmem:[%s7 + $0x8] sm:$0xff]
    %v307 = vld [vmem:[%s7 + $0x10] sm:$0xff]
    %v308 = vld [vmem:[%s7 + $0x18] sm:$0xff]
    %v309 = vld [vmem:[%s8] sm:$0x1]
    %v311 = vlaneseq
    %v312 = vshrl.u32 %v311, 7
    %v313 = vsub.s32 0, %v312
    %v314 = vrot.slane %v309, %v313
    %v317 = vsel %vm143, %v304, 0
    %319 = vmatprep.subr.mxu0 0.0
    %320 = vmatpush1.msra.mxu0 %v305
    %321 = vmatprep.subr.mxu0 0.0
    %322 = vmatpush1.msra.mxu0 %v306
    %323 = vmatprep.subr.mxu0 0.0
    %324 = vmatpush1.msra.mxu0 %v307
    %325 = vmatprep.subr.mxu0 0.0
    %326 = vmatpush1.msra.mxu0 %v308
    %327 = vmatprep.subr.mxu0 0.0
    %328 = vmatpush1.msra.mxu0 0.0
    %329 = vmatprep.subr.mxu0 0.0
    %330 = vmatpush1.msra.mxu0 0.0
    %331 = vmatprep.subr.mxu0 0.0
    %332 = vmatpush1.msra.mxu0 0.0
    %333 = vmatprep.subr.mxu0 0.0
    %334 = vmatpush1.msra.mxu0 0.0
    %335 = vmatprep.subr.mxu0 0.0
    %336 = vmatpush1.msra.mxu0 0.0
    %337 = vmatprep.subr.mxu0 0.0
    %338 = vmatpush1.msra.mxu0 0.0
    %339 = vmatprep.subr.mxu0 0.0
    %340 = vmatpush1.msra.mxu0 0.0
    %341 = vmatprep.subr.mxu0 0.0
    %342 = vmatpush1.msra.mxu0 0.0
    %343 = vmatprep.subr.mxu0 0.0
    %344 = vmatpush1.msra.mxu0 0.0
    %345 = vmatprep.subr.mxu0 0.0
    %346 = vmatpush1.msra.mxu0 0.0
    %347 = vmatprep.subr.mxu0 0.0
    %348 = vmatpush1.msra.mxu0 0.0
    %349 = vmatprep.subr.mxu0 0.0
    %350 = vmatpush1.msra.mxu0 0.0
    %351 = vmatprep.subr.mxu0 0.0
    %352 = vmatpush1.msra.mxu0 0.0
    %353 = vmatprep.subr.mxu0 0.0
    %354 = vmatpush1.msra.mxu0 0.0
    %355 = vmatprep.subr.mxu0 0.0
    %356 = vmatpush1.msra.mxu0 0.0
    %357 = vmatprep.subr.mxu0 0.0
    %358 = vmatpush1.msra.mxu0 0.0
    %359 = vmatprep.subr.mxu0 0.0
    %360 = vmatpush1.msra.mxu0 0.0
    %361 = vmatprep.subr.mxu0 0.0
    %362 = vmatpush1.msra.mxu0 0.0
    %363 = vmatprep.subr.mxu0 0.0
    %364 = vmatpush1.msra.mxu0 0.0
    %365 = vmatprep.subr.mxu0 0.0
    %366 = vmatpush1.msra.mxu0 0.0
    %367 = vmatprep.subr.mxu0 0.0
    %368 = vmatpush1.msra.mxu0 0.0
    %369 = vmatprep.subr.mxu0 0.0
    %370 = vmatpush1.msra.mxu0 0.0
    %371 = vmatprep.subr.mxu0 0.0
    %372 = vmatpush1.msra.mxu0 0.0
    %373 = vmatprep.subr.mxu0 0.0
    %374 = vmatpush1.msra.mxu0 0.0
    %375 = vmatprep.subr.mxu0 0.0
    %376 = vmatpush1.msra.mxu0 0.0
    %377 = vmatprep.subr.mxu0 0.0
    %378 = vmatpush1.msra.mxu0 0.0
    %379 = vmatprep.subr.mxu0 0.0
    %380 = vmatpush1.msra.mxu0 0.0
    %381 = vmatprep.subr.mxu0 0.0
    %382 = vmatpush1.msra.mxu0 0.0
    %383 = vmatprep.mubr.f32.mxu0 0.0
    %384 = vmatmul.mubr.f32.gmra.mrb[0].mxu0 %v317
    %v385 = vpop.f32.mrb[0].mxu0
    %v386 = vadd.f32 %v314, %v385
    %v387 = vpop.f32.mrb[0].mxu0
    %388 = vdwg.mxu0
    %vm389 = vcmask 48128
    %v390 = vsel %vm389, %v386, -inf
    %391 = vmax.xlane.f32.xlu0 %v390
    %v392 = vpop.xlane.xlu0 %391
    %v393 = vsub.f32 %v386, %v392
    %v394 = vmul.f32 %v393, 1.442695
    %v395 = vpow.pop %v394
    %v396 = vsel %vm389, %v395, 0.0
    %397 = vadd.xlane.f32.xlu0 %v396
    %v398 = vpop.xlane.xlu0 %397
    %v399 = vlog2.pop %v398
    %v400 = vmul.f32 %v399, 0.6931472
    %v401 = vsub.f32 %v393, %v400
    %402 = vst.msk [vmem:[#allocation2] sm:$0xff] %vm389, %v401
    // Predicated region
    $region38: #{tpu_custom_call.1} parent=1 // pred_check
      _
    $region39: #{tpu_custom_call.1} parent=1 // pred_check_branch
      %404 = sbr.rel (0) target = $region41
    $region40: #{tpu_custom_call.1} parent=1 // pred_region
      %s406 = ssub.s32 128, 128
      %407 = vsyncadd [#allocation3], %s406
      %s409 = sshll.u32 [#allocation2], 4
      %s410 = int_to_ptr.vmem [resolvable:$true] %s409
      %412 = dma.vmem_to_hbm [thread:$0]  %s410, 128, %s9, [#allocation3]
    $region41: #{tpu_custom_call.1} parent=1 // pred_fallthru
      _
    // Predicated region
    $region42: #{tpu_custom_call.1} parent=1 // pred_check
      _
    $region43: #{tpu_custom_call.1} parent=1 // pred_check_branch
      %414 = sbr.rel (0) target = $region45
    $region44: #{tpu_custom_call.1} parent=1 // pred_region
      %415 = dma.done [#allocation3], 128
    $region45: #{tpu_custom_call.1} parent=1 // pred_fallthru
      _
    %416 = vsyncpa [#allocation3], 1

</llo_original>
